<compile_context>
chip_gen: v5e
topology: v5e:2x2
jax: 0.10.0
libtpu: 0.0.40
codegen_flags: <defaults>
</compile_context>

<pallas_src>
import math

import jax
import jax.numpy as jnp
from jax import lax
from jax.experimental import pallas as pl
from jax.experimental.pallas import tpu as pltpu


def _vmem_limit_bytes():
    """Generation-aware scoped-VMEM limit (v5e/v6e: 128 MiB phys, v7x: 64 MiB)."""
    try:
        cap = pltpu.get_tpu_info().vmem_capacity_bytes
    except Exception:
        return 32 << 20
    return int(min(cap * 3 // 4, 96 << 20))


def _make_fused_kernel(*, save_outputs, scale):
    """Fused QKV projection + sampled attention + output projection.

    Grid = (B, H).  Per step:
      q,k,v  = x @ Wq_h / Wk_h / Wv_h          (MXU, bf16 operands, f32 acc)
      sampled softmax through the (L, L) count matrix (f32 VPU/EUP)
      ctx    = weights @ v                      (MXU)
      out   += ctx @ Wo_h  (+ bias at h == 0)   (MXU, accumulated in the
                                                 revisited (1, L, D) block)
    """

    def kernel(*refs):
        if save_outputs:
            (cnt_ref, kidx_ref, x_ref, wqkv_ref, wo_ref, bias_ref,
             o_ref, a_ref) = refs
        else:
            cnt_ref, x_ref, wqkv_ref, wo_ref, bias_ref, o_ref = refs
            kidx_ref = a_ref = None

        xb = x_ref[0]                                     # (L, D) bf16
        # Per-head projections; head selection was done by the BlockSpec DMA.
        q = jnp.dot(xb, wqkv_ref[0, 0], preferred_element_type=jnp.float32)
        k = jnp.dot(xb, wqkv_ref[1, 0], preferred_element_type=jnp.float32)
        v = jnp.dot(xb, wqkv_ref[2, 0], preferred_element_type=jnp.float32)

        # Fold the softmax scale into q once ((L, Dh) pass, not (L, L)).
        q = (q * scale).astype(jnp.bfloat16)
        k = k.astype(jnp.bfloat16)

        scores = lax.dot_general(q, k, (((1,), (1,)), ((), ())),
                                 preferred_element_type=jnp.float32)  # (L, L)

        cnt = cnt_ref[...]                                # (L, L) sample counts
        # Every row has >= 1 sampled key (key_indices is (L, S), S >= 1), so
        # the masked max / denominator below are always well defined.
        s = jnp.where(cnt > 0.0, scores, jnp.float32(-1e30))
        m = jnp.max(s, axis=-1, keepdims=True)            # max over sampled keys
        p = jnp.exp(s - m)                                # exactly 0 unsampled (f32)
        cp = cnt * p                                      # reused: denom + weights
        denom = jnp.sum(cp, axis=-1, keepdims=True)       # duplicates counted
        inv = pl.reciprocal(denom, approx=True)           # EUP slot

        w = (cp * inv).astype(jnp.bfloat16)               # duplicate-aware weights
        ctx = jnp.dot(w, v.astype(jnp.bfloat16),
                      preferred_element_type=jnp.float32)             # (L, Dh)
        contrib = jnp.dot(ctx.astype(jnp.bfloat16), wo_ref[0],
                          preferred_element_type=jnp.float32)         # (L, D)

        @pl.when(pl.program_id(1) == 0)
        def _():                                          # init accumulator
            o_ref[0] = bias_ref[...] + contrib

        @pl.when(pl.program_id(1) != 0)
        def _():                                          # accumulate heads
            o_ref[0] = o_ref[0] + contrib

        if save_outputs:
            # In-kernel gather of the S sampled softmax weights: stores only
            # (L, S) instead of the full (L, L) map (avoids the old
            # B*H*L*L HBM write + take_along_axis re-read).
            kidx = kidx_ref[...]                          # (L, S) int32
            col = lax.broadcasted_iota(jnp.int32, p.shape, 1)
            cols = []
            for si in range(kidx.shape[-1]):              # small static S loop
                sel = col == kidx[:, si:si + 1]
                cols.append(jnp.sum(jnp.where(sel, p, 0.0),
                                    axis=-1, keepdims=True))
            a_ref[0, 0] = jnp.concatenate(cols, axis=-1) * inv

    return kernel


def geospatial_self_attention(x, key_indices, params, n_head, save_outputs=True):
    B, L, D = x.shape
    H = n_head
    Dh = D // H
    S = key_indices.shape[-1]
    scale = 1.0 / math.sqrt(Dh)

    # Head-major, MXU-ready (bf16) weights.  torch Linear computes x @ W.T.
    def per_head_cols(w):                                 # -> (H, D, Dh)
        return jnp.transpose(w.T.reshape(D, H, Dh), (1, 0, 2))

    w_qkv = jnp.stack([per_head_cols(params["wq"]),
                       per_head_cols(params["wk"]),
                       per_head_cols(params["wv"])],
                      axis=0).astype(jnp.bfloat16)        # (3, H, D, Dh)
    wo_h = params["wo"].T.reshape(H, Dh, D).astype(jnp.bfloat16)    # (H, Dh, D)
    bias = params["bo"].reshape(1, D).astype(jnp.float32)

    x_bf = x.astype(jnp.bfloat16)

    # (L, L) sample-count matrix (duplicates counted) — tiny plain-JAX glue.
    cnt = jax.nn.one_hot(key_indices, L, dtype=jnp.float32).sum(axis=1)

    kernel = _make_fused_kernel(save_outputs=save_outputs, scale=scale)

    in_specs = [pl.BlockSpec((L, L), lambda b, h: (0, 0))]           # cnt pinned
    inputs = [cnt]
    if save_outputs:
        in_specs.append(pl.BlockSpec((L, S), lambda b, h: (0, 0)))   # kidx pinned
        inputs.append(key_indices.astype(jnp.int32))
    in_specs += [
        pl.BlockSpec((1, L, D), lambda b, h: (b, 0, 0)),             # x (per batch)
        pl.BlockSpec((3, 1, D, Dh), lambda b, h: (0, h, 0, 0)),      # Wq/Wk/Wv, head h
        pl.BlockSpec((1, Dh, D), lambda b, h: (h, 0, 0)),            # Wo rows, head h
        pl.BlockSpec((1, D), lambda b, h: (0, 0)),                   # bias pinned
    ]
    inputs += [x_bf, w_qkv, wo_h, bias]

    out_shape = jax.ShapeDtypeStruct((B, L, D), jnp.float32)
    out_specs = pl.BlockSpec((1, L, D), lambda b, h: (b, 0, 0))      # revisited over h
    if save_outputs:
        out_shape = (out_shape, jax.ShapeDtypeStruct((B, H, L, S), jnp.float32))
        out_specs = (out_specs,
                     pl.BlockSpec((1, 1, L, S), lambda b, h: (b, h, 0, 0)))

    res = pl.pallas_call(
        kernel,
        out_shape=out_shape,
        grid=(B, H),
        in_specs=in_specs,
        out_specs=out_specs,
        compiler_params=pltpu.CompilerParams(
            dimension_semantics=("parallel", "arbitrary"),
            vmem_limit_bytes=_vmem_limit_bytes()),
    )(*inputs)

    if save_outputs:
        out, A = res
        return out, jnp.squeeze(A)          # matches torch A.squeeze()
    return res, None


# ---------------- pure-JAX reference (mirrors the torch code) ----------------
def reference(x, key_indices, params, n_head):
    B, L, D = x.shape
    H = n_head
    q = (x @ params["wq"].T).reshape(B, L, H, -1).transpose(0, 2, 1, 3)
    k = (x @ params["wk"].T).reshape(B, L, H, -1).transpose(0, 2, 1, 3)
    v = (x @ params["wv"].T).reshape(B, L, H, -1).transpose(0, 2, 1, 3)
    scale = 1.0 / math.sqrt(q.shape[-1])
    k_s = k[:, :, key_indices, :]
    v_s = v[:, :, key_indices, :]
    scores = jnp.einsum('bhlkd,bhlds->bhlks',
                        q[:, :, :, None, :], jnp.swapaxes(k_s, -2, -1))
    A = jax.nn.softmax(scale * scores, axis=-1)
    V = jnp.einsum('bhlks,bhlsd->bhlkd', A, v_s)[:, :, :, 0, :]
    out = V.transpose(0, 2, 1, 3).reshape(B, L, -1)
    out = out @ params["wo"].T + params["bo"]
    return out, jnp.squeeze(A)


if __name__ == "__main__":
    B, L, d_model, n_head, S = 2, 16, 32, 4, 8

    key = jax.random.PRNGKey(0)
    kx, ki, kq, kk, kv, ko, kb = jax.random.split(key, 7)

    x = jax.random.normal(kx, (B, L, d_model), dtype=jnp.float32)
    key_indices = jax.random.randint(ki, (L, S), 0, L, dtype=jnp.int32)

    w_scale = 1.0 / math.sqrt(d_model)
    params = {
        "wq": w_scale * jax.random.normal(kq, (d_model, d_model), jnp.float32),
        "wk": w_scale * jax.random.normal(kk, (d_model, d_model), jnp.float32),
        "wv": w_scale * jax.random.normal(kv, (d_model, d_model), jnp.float32),
        "wo": w_scale * jax.random.normal(ko, (d_model, d_model), jnp.float32),
        "bo": w_scale * jax.random.normal(kb, (d_model,), jnp.float32),
    }

    out, A = geospatial_self_attention(x, key_indices, params, n_head,
                                       save_outputs=True)
    out = jax.block_until_ready(out)
    A = jax.block_until_ready(A)

    out_ref, A_ref = reference(x, key_indices, params, n_head)

    assert out.shape == (B, L, d_model), out.shape
    assert A.shape == (B, n_head, L, S), A.shape
    # bf16 MXU operands (f32 accumulation) => ~1e-3 relative deviation from the
    # all-f32 reference; 1e-2 still catches any real indexing/softmax bug.
    assert jnp.allclose(out, out_ref, rtol=1e-2, atol=1e-2), "output mismatch"
    assert jnp.allclose(A, A_ref, rtol=1e-2, atol=1e-2), "attention mismatch"

    # save_outputs=False path: kernel has no attention-map output at all.
    out2, A2 = geospatial_self_attention(x, key_indices, params, n_head,
                                         save_outputs=False)
    out2 = jax.block_until_ready(out2)
    assert A2 is None
    assert jnp.allclose(out2, out_ref, rtol=1e-2, atol=1e-2), "output mismatch (no-A)"

    print("KERNEL_OK")
</pallas_src>

<mosaic_0001>
module attributes {stable_mosaic.version = 11 : i64} {
  func.func @kernel(%arg0: i32, %arg1: i32, %arg2: memref<16x16xf32, #tpu.memory_space<vmem>>, %arg3: memref<16x8xi32, #tpu.memory_space<vmem>>, %arg4: memref<1x16x32xbf16, #tpu.memory_space<vmem>>, %arg5: memref<3x1x32x8xbf16, #tpu.memory_space<vmem>>, %arg6: memref<1x8x32xbf16, #tpu.memory_space<vmem>>, %arg7: memref<1x32xf32, #tpu.memory_space<vmem>>, %arg8: memref<1x16x32xf32, #tpu.memory_space<vmem>>, %arg9: memref<1x1x16x8xf32, #tpu.memory_space<vmem>>) attributes {dimension_semantics = [#tpu.dimension_semantics<parallel>, #tpu.dimension_semantics<arbitrary>], iteration_bounds = array<i64: 2, 4>, scalar_prefetch = 0 : i64, scratch_operands = 0 : i64, tpu.core_type = #tpu.core_type<tc>, window_params = [{pipeline_mode = #tpu.pipeline_mode<synchronous>, transform_indices = @transform_0, window_bounds = array<i64: 16, 16>}, {pipeline_mode = #tpu.pipeline_mode<synchronous>, transform_indices = @transform_1, window_bounds = array<i64: 16, 8>}, {transform_indices = @transform_2, window_bounds = array<i64: 1, 16, 32>}, {transform_indices = @transform_3, window_bounds = array<i64: 3, 1, 32, 8>}, {transform_indices = @transform_4, window_bounds = array<i64: 1, 8, 32>}, {pipeline_mode = #tpu.pipeline_mode<synchronous>, transform_indices = @transform_5, window_bounds = array<i64: 1, 32>}, {transform_indices = @transform_6, window_bounds = array<i64: 1, 16, 32>}, {transform_indices = @transform_7, window_bounds = array<i64: 1, 1, 16, 8>}]} {
    %c0 = arith.constant 0 : index
    %c0_0 = arith.constant 0 : index
    %c0_1 = arith.constant 0 : index
    %0 = vector.load %arg4[%c0, %c0_0, %c0_1] : memref<1x16x32xbf16, #tpu.memory_space<vmem>>, vector<1x16x32xbf16>
    %1 = vector.shape_cast %0 : vector<1x16x32xbf16> to vector<16x32xbf16>
    %c0_2 = arith.constant 0 : index
    %c0_3 = arith.constant 0 : index
    %c0_4 = arith.constant 0 : index
    %c0_5 = arith.constant 0 : index
    %2 = vector.load %arg5[%c0_2, %c0_3, %c0_4, %c0_5] : memref<3x1x32x8xbf16, #tpu.memory_space<vmem>>, vector<1x1x32x8xbf16>
    %3 = vector.shape_cast %2 : vector<1x1x32x8xbf16> to vector<32x8xbf16>
    %cst = arith.constant dense<0.000000e+00> : vector<16x8xf32>
    %4 = tpu.matmul %1, %3, %cst {dimension_numbers = #tpu.dot_dimension_numbers<[1], [0], [0], [1], [0, 0, 1, 1], [], []>} : vector<16x32xbf16>, vector<32x8xbf16>, vector<16x8xf32> -> vector<16x8xf32>
    %c1 = arith.constant 1 : index
    %c0_6 = arith.constant 0 : index
    %c0_7 = arith.constant 0 : index
    %c0_8 = arith.constant 0 : index
    %5 = vector.load %arg5[%c1, %c0_6, %c0_7, %c0_8] : memref<3x1x32x8xbf16, #tpu.memory_space<vmem>>, vector<1x1x32x8xbf16>
    %6 = vector.shape_cast %5 : vector<1x1x32x8xbf16> to vector<32x8xbf16>
    %cst_9 = arith.constant dense<0.000000e+00> : vector<16x8xf32>
    %7 = tpu.matmul %1, %6, %cst_9 {dimension_numbers = #tpu.dot_dimension_numbers<[1], [0], [0], [1], [0, 0, 1, 1], [], []>} : vector<16x32xbf16>, vector<32x8xbf16>, vector<16x8xf32> -> vector<16x8xf32>
    %c2 = arith.constant 2 : index
    %c0_10 = arith.constant 0 : index
    %c0_11 = arith.constant 0 : index
    %c0_12 = arith.constant 0 : index
    %8 = vector.load %arg5[%c2, %c0_10, %c0_11, %c0_12] : memref<3x1x32x8xbf16, #tpu.memory_space<vmem>>, vector<1x1x32x8xbf16>
    %9 = vector.shape_cast %8 : vector<1x1x32x8xbf16> to vector<32x8xbf16>
    %cst_13 = arith.constant dense<0.000000e+00> : vector<16x8xf32>
    %10 = tpu.matmul %1, %9, %cst_13 {dimension_numbers = #tpu.dot_dimension_numbers<[1], [0], [0], [1], [0, 0, 1, 1], [], []>} : vector<16x32xbf16>, vector<32x8xbf16>, vector<16x8xf32> -> vector<16x8xf32>
    %cst_14 = arith.constant 0.353553385 : f32
    %11 = vector.broadcast %cst_14 : f32 to vector<16x8xf32>
    %12 = arith.mulf %4, %11 : vector<16x8xf32>
    %13 = arith.truncf %12 : vector<16x8xf32> to vector<16x8xbf16>
    %14 = arith.truncf %7 : vector<16x8xf32> to vector<16x8xbf16>
    %cst_15 = arith.constant dense<0.000000e+00> : vector<16x16xf32>
    %15 = tpu.matmul %13, %14, %cst_15 {dimension_numbers = #tpu.dot_dimension_numbers<[1], [1], [0], [0], [0, 0, 1, 0], [], []>} : vector<16x8xbf16>, vector<16x8xbf16>, vector<16x16xf32> -> vector<16x16xf32>
    %c0_16 = arith.constant 0 : index
    %c0_17 = arith.constant 0 : index
    %16 = vector.load %arg2[%c0_16, %c0_17] : memref<16x16xf32, #tpu.memory_space<vmem>>, vector<16x16xf32>
    %cst_18 = arith.constant 0.000000e+00 : f32
    %17 = vector.broadcast %cst_18 : f32 to vector<16x16xf32>
    %18 = arith.cmpf ogt, %16, %17 : vector<16x16xf32>
    %cst_19 = arith.constant -1.000000e+30 : f32
    %19 = vector.broadcast %cst_19 : f32 to vector<16x16xf32>
    %20 = arith.select %18, %15, %19 : vector<16x16xi1>, vector<16x16xf32>
    %cst_20 = arith.constant dense<0xFF800000> : vector<16xf32>
    %21 = vector.multi_reduction <maximumf>, %20, %cst_20 [1] : vector<16x16xf32> to vector<16xf32>
    %22 = vector.shape_cast %21 : vector<16xf32> to vector<16x1xf32>
    %23 = vector.broadcast %22 : vector<16x1xf32> to vector<16x16xf32>
    %24 = arith.subf %20, %23 : vector<16x16xf32>
    %25 = math.exp %24 : vector<16x16xf32>
    %26 = arith.mulf %16, %25 : vector<16x16xf32>
    %cst_21 = arith.constant dense<0.000000e+00> : vector<16xf32>
    %27 = vector.multi_reduction <add>, %26, %cst_21 [1] : vector<16x16xf32> to vector<16xf32>
    %28 = vector.shape_cast %27 : vector<16xf32> to vector<16x1xf32>
    %29 = tpu.reciprocal %28 {approx = true} : vector<16x1xf32> -> vector<16x1xf32>
    %30 = vector.broadcast %29 : vector<16x1xf32> to vector<16x16xf32>
    %31 = arith.mulf %26, %30 : vector<16x16xf32>
    %32 = arith.truncf %31 : vector<16x16xf32> to vector<16x16xbf16>
    %33 = arith.truncf %10 : vector<16x8xf32> to vector<16x8xbf16>
    %cst_22 = arith.constant dense<0.000000e+00> : vector<16x8xf32>
    %34 = tpu.matmul %32, %33, %cst_22 {dimension_numbers = #tpu.dot_dimension_numbers<[1], [0], [0], [1], [0, 0, 1, 1], [], []>} : vector<16x16xbf16>, vector<16x8xbf16>, vector<16x8xf32> -> vector<16x8xf32>
    %35 = arith.truncf %34 : vector<16x8xf32> to vector<16x8xbf16>
    %c0_23 = arith.constant 0 : index
    %c0_24 = arith.constant 0 : index
    %c0_25 = arith.constant 0 : index
    %36 = vector.load %arg6[%c0_23, %c0_24, %c0_25] : memref<1x8x32xbf16, #tpu.memory_space<vmem>>, vector<1x8x32xbf16>
    %37 = vector.shape_cast %36 : vector<1x8x32xbf16> to vector<8x32xbf16>
    %cst_26 = arith.constant dense<0.000000e+00> : vector<16x32xf32>
    %38 = tpu.matmul %35, %37, %cst_26 {dimension_numbers = #tpu.dot_dimension_numbers<[1], [0], [0], [1], [0, 0, 1, 1], [], []>} : vector<16x8xbf16>, vector<8x32xbf16>, vector<16x32xf32> -> vector<16x32xf32>
    %c0_i32 = arith.constant 0 : i32
    %39 = arith.cmpi eq, %arg1, %c0_i32 : i32
    %40 = arith.extui %39 : i1 to i32
    %c0_i32_27 = arith.constant 0 : i32
    %41 = arith.cmpi ne, %40, %c0_i32_27 : i32
    scf.if %41 {
      %c0_52 = arith.constant 0 : index
      %c0_53 = arith.constant 0 : index
      %109 = vector.load %arg7[%c0_52, %c0_53] : memref<1x32xf32, #tpu.memory_space<vmem>>, vector<1x32xf32>
      %110 = vector.broadcast %109 : vector<1x32xf32> to vector<16x32xf32>
      %111 = arith.addf %110, %38 : vector<16x32xf32>
      %c0_54 = arith.constant 0 : index
      %c0_55 = arith.constant 0 : index
      %c0_56 = arith.constant 0 : index
      %112 = vector.load %arg8[%c0_54, %c0_55, %c0_56] : memref<1x16x32xf32, #tpu.memory_space<vmem>>, vector<1x16x32xf32>
      %113 = vector.shape_cast %112 : vector<1x16x32xf32> to vector<16x32xf32>
      %114 = vector.shape_cast %111 : vector<16x32xf32> to vector<1x16x32xf32>
      tpu.vector_store %arg8[%c0_54, %c0_55, %c0_56], %114 {strides = array<i32>} : memref<1x16x32xf32, #tpu.memory_space<vmem>>, vector<1x16x32xf32>,
    } else {
    }
    %c0_i32_28 = arith.constant 0 : i32
    %42 = arith.cmpi ne, %arg1, %c0_i32_28 : i32
    %43 = arith.extui %42 : i1 to i32
    %c0_i32_29 = arith.constant 0 : i32
    %44 = arith.cmpi ne, %43, %c0_i32_29 : i32
    scf.if %44 {
      %c0_52 = arith.constant 0 : index
      %c0_53 = arith.constant 0 : index
      %c0_54 = arith.constant 0 : index
      %109 = vector.load %arg8[%c0_52, %c0_53, %c0_54] : memref<1x16x32xf32, #tpu.memory_space<vmem>>, vector<1x16x32xf32>
      %110 = vector.shape_cast %109 : vector<1x16x32xf32> to vector<16x32xf32>
      %111 = arith.addf %110, %38 : vector<16x32xf32>
      %c0_55 = arith.constant 0 : index
      %c0_56 = arith.constant 0 : index
      %c0_57 = arith.constant 0 : index
      %112 = vector.load %arg8[%c0_55, %c0_56, %c0_57] : memref<1x16x32xf32, #tpu.memory_space<vmem>>, vector<1x16x32xf32>
      %113 = vector.shape_cast %112 : vector<1x16x32xf32> to vector<16x32xf32>
      %114 = vector.shape_cast %111 : vector<16x32xf32> to vector<1x16x32xf32>
      tpu.vector_store %arg8[%c0_55, %c0_56, %c0_57], %114 {strides = array<i32>} : memref<1x16x32xf32, #tpu.memory_space<vmem>>, vector<1x16x32xf32>,
    } else {
    }
    %c0_30 = arith.constant 0 : index
    %c0_31 = arith.constant 0 : index
    %45 = vector.load %arg3[%c0_30, %c0_31] : memref<16x8xi32, #tpu.memory_space<vmem>>, vector<16x8xi32>
    %46 = tpu.iota {dimensions = array<i32: 1>} : vector<16x16xi32>
    %47 = vector.extract_strided_slice %45 {offsets = [0, 0], sizes = [16, 1], strides = [1, 1]} : vector<16x8xi32> to vector<16x1xi32>
    %48 = vector.broadcast %47 : vector<16x1xi32> to vector<16x16xi32>
    %49 = arith.cmpi eq, %46, %48 : vector<16x16xi32>
    %cst_32 = arith.constant 0.000000e+00 : f32
    %50 = vector.broadcast %cst_32 : f32 to vector<16x16xf32>
    %51 = arith.select %49, %25, %50 : vector<16x16xi1>, vector<16x16xf32>
    %cst_33 = arith.constant dense<0.000000e+00> : vector<16xf32>
    %52 = vector.multi_reduction <add>, %51, %cst_33 [1] : vector<16x16xf32> to vector<16xf32>
    %53 = vector.shape_cast %52 : vector<16xf32> to vector<16x1xf32>
    %54 = vector.extract_strided_slice %45 {offsets = [0, 1], sizes = [16, 1], strides = [1, 1]} : vector<16x8xi32> to vector<16x1xi32>
    %55 = vector.broadcast %54 : vector<16x1xi32> to vector<16x16xi32>
    %56 = arith.cmpi eq, %46, %55 : vector<16x16xi32>
    %cst_34 = arith.constant 0.000000e+00 : f32
    %57 = vector.broadcast %cst_34 : f32 to vector<16x16xf32>
    %58 = arith.select %56, %25, %57 : vector<16x16xi1>, vector<16x16xf32>
    %cst_35 = arith.constant dense<0.000000e+00> : vector<16xf32>
    %59 = vector.multi_reduction <add>, %58, %cst_35 [1] : vector<16x16xf32> to vector<16xf32>
    %60 = vector.shape_cast %59 : vector<16xf32> to vector<16x1xf32>
    %61 = vector.extract_strided_slice %45 {offsets = [0, 2], sizes = [16, 1], strides = [1, 1]} : vector<16x8xi32> to vector<16x1xi32>
    %62 = vector.broadcast %61 : vector<16x1xi32> to vector<16x16xi32>
    %63 = arith.cmpi eq, %46, %62 : vector<16x16xi32>
    %cst_36 = arith.constant 0.000000e+00 : f32
    %64 = vector.broadcast %cst_36 : f32 to vector<16x16xf32>
    %65 = arith.select %63, %25, %64 : vector<16x16xi1>, vector<16x16xf32>
    %cst_37 = arith.constant dense<0.000000e+00> : vector<16xf32>
    %66 = vector.multi_reduction <add>, %65, %cst_37 [1] : vector<16x16xf32> to vector<16xf32>
    %67 = vector.shape_cast %66 : vector<16xf32> to vector<16x1xf32>
    %68 = vector.extract_strided_slice %45 {offsets = [0, 3], sizes = [16, 1], strides = [1, 1]} : vector<16x8xi32> to vector<16x1xi32>
    %69 = vector.broadcast %68 : vector<16x1xi32> to vector<16x16xi32>
    %70 = arith.cmpi eq, %46, %69 : vector<16x16xi32>
    %cst_38 = arith.constant 0.000000e+00 : f32
    %71 = vector.broadcast %cst_38 : f32 to vector<16x16xf32>
    %72 = arith.select %70, %25, %71 : vector<16x16xi1>, vector<16x16xf32>
    %cst_39 = arith.constant dense<0.000000e+00> : vector<16xf32>
    %73 = vector.multi_reduction <add>, %72, %cst_39 [1] : vector<16x16xf32> to vector<16xf32>
    %74 = vector.shape_cast %73 : vector<16xf32> to vector<16x1xf32>
    %75 = vector.extract_strided_slice %45 {offsets = [0, 4], sizes = [16, 1], strides = [1, 1]} : vector<16x8xi32> to vector<16x1xi32>
    %76 = vector.broadcast %75 : vector<16x1xi32> to vector<16x16xi32>
    %77 = arith.cmpi eq, %46, %76 : vector<16x16xi32>
    %cst_40 = arith.constant 0.000000e+00 : f32
    %78 = vector.broadcast %cst_40 : f32 to vector<16x16xf32>
    %79 = arith.select %77, %25, %78 : vector<16x16xi1>, vector<16x16xf32>
    %cst_41 = arith.constant dense<0.000000e+00> : vector<16xf32>
    %80 = vector.multi_reduction <add>, %79, %cst_41 [1] : vector<16x16xf32> to vector<16xf32>
    %81 = vector.shape_cast %80 : vector<16xf32> to vector<16x1xf32>
    %82 = vector.extract_strided_slice %45 {offsets = [0, 5], sizes = [16, 1], strides = [1, 1]} : vector<16x8xi32> to vector<16x1xi32>
    %83 = vector.broadcast %82 : vector<16x1xi32> to vector<16x16xi32>
    %84 = arith.cmpi eq, %46, %83 : vector<16x16xi32>
    %cst_42 = arith.constant 0.000000e+00 : f32
    %85 = vector.broadcast %cst_42 : f32 to vector<16x16xf32>
    %86 = arith.select %84, %25, %85 : vector<16x16xi1>, vector<16x16xf32>
    %cst_43 = arith.constant dense<0.000000e+00> : vector<16xf32>
    %87 = vector.multi_reduction <add>, %86, %cst_43 [1] : vector<16x16xf32> to vector<16xf32>
    %88 = vector.shape_cast %87 : vector<16xf32> to vector<16x1xf32>
    %89 = vector.extract_strided_slice %45 {offsets = [0, 6], sizes = [16, 1], strides = [1, 1]} : vector<16x8xi32> to vector<16x1xi32>
    %90 = vector.broadcast %89 : vector<16x1xi32> to vector<16x16xi32>
    %91 = arith.cmpi eq, %46, %90 : vector<16x16xi32>
    %cst_44 = arith.constant 0.000000e+00 : f32
    %92 = vector.broadcast %cst_44 : f32 to vector<16x16xf32>
    %93 = arith.select %91, %25, %92 : vector<16x16xi1>, vector<16x16xf32>
    %cst_45 = arith.constant dense<0.000000e+00> : vector<16xf32>
    %94 = vector.multi_reduction <add>, %93, %cst_45 [1] : vector<16x16xf32> to vector<16xf32>
    %95 = vector.shape_cast %94 : vector<16xf32> to vector<16x1xf32>
    %96 = vector.extract_strided_slice %45 {offsets = [0, 7], sizes = [16, 1], strides = [1, 1]} : vector<16x8xi32> to vector<16x1xi32>
    %97 = vector.broadcast %96 : vector<16x1xi32> to vector<16x16xi32>
    %98 = arith.cmpi eq, %46, %97 : vector<16x16xi32>
    %cst_46 = arith.constant 0.000000e+00 : f32
    %99 = vector.broadcast %cst_46 : f32 to vector<16x16xf32>
    %100 = arith.select %98, %25, %99 : vector<16x16xi1>, vector<16x16xf32>
    %cst_47 = arith.constant dense<0.000000e+00> : vector<16xf32>
    %101 = vector.multi_reduction <add>, %100, %cst_47 [1] : vector<16x16xf32> to vector<16xf32>
    %102 = vector.shape_cast %101 : vector<16xf32> to vector<16x1xf32>
    %103 = tpu.concatenate %53, %60, %67, %74, %81, %88, %95, %102 in 1 : vector<16x1xf32>, vector<16x1xf32>, vector<16x1xf32>, vector<16x1xf32>, vector<16x1xf32>, vector<16x1xf32>, vector<16x1xf32>, vector<16x1xf32> -> vector<16x8xf32>
    %104 = vector.broadcast %29 : vector<16x1xf32> to vector<16x8xf32>
    %105 = arith.mulf %103, %104 : vector<16x8xf32>
    %c0_48 = arith.constant 0 : index
    %c0_49 = arith.constant 0 : index
    %c0_50 = arith.constant 0 : index
    %c0_51 = arith.constant 0 : index
    %106 = vector.load %arg9[%c0_48, %c0_49, %c0_50, %c0_51] : memref<1x1x16x8xf32, #tpu.memory_space<vmem>>, vector<1x1x16x8xf32>
    %107 = vector.shape_cast %106 : vector<1x1x16x8xf32> to vector<16x8xf32>
    %108 = vector.shape_cast %105 : vector<16x8xf32> to vector<1x1x16x8xf32>
    tpu.vector_store %arg9[%c0_48, %c0_49, %c0_50, %c0_51], %108 {strides = array<i32>} : memref<1x1x16x8xf32, #tpu.memory_space<vmem>>, vector<1x1x16x8xf32>,
    return
  }
  func.func @transform_0(%arg0: i32, %arg1: i32) -> (i32, i32) {
    %c0_i32 = arith.constant 0 : i32
    %c0_i32_0 = arith.constant 0 : i32
    %c0_i32_1 = arith.constant 0 : i32
    return %c0_i32, %c0_i32_0 : i32, i32
  }
  func.func @transform_1(%arg0: i32, %arg1: i32) -> (i32, i32) {
    %c0_i32 = arith.constant 0 : i32
    %c0_i32_0 = arith.constant 0 : i32
    %c0_i32_1 = arith.constant 0 : i32
    return %c0_i32, %c0_i32_0 : i32, i32
  }
  func.func @transform_2(%arg0: i32, %arg1: i32) -> (i32, i32, i32) {
    %c0_i32 = arith.constant 0 : i32
    %c0_i32_0 = arith.constant 0 : i32
    %c0_i32_1 = arith.constant 0 : i32
    return %arg0, %c0_i32, %c0_i32_0 : i32, i32, i32
  }
  func.func @transform_3(%arg0: i32, %arg1: i32) -> (i32, i32, i32, i32) {
    %c0_i32 = arith.constant 0 : i32
    %c0_i32_0 = arith.constant 0 : i32
    %c0_i32_1 = arith.constant 0 : i32
    %c0_i32_2 = arith.constant 0 : i32
    return %c0_i32, %arg1, %c0_i32_0, %c0_i32_1 : i32, i32, i32, i32
  }
  func.func @transform_4(%arg0: i32, %arg1: i32) -> (i32, i32, i32) {
    %c0_i32 = arith.constant 0 : i32
    %c0_i32_0 = arith.constant 0 : i32
    %c0_i32_1 = arith.constant 0 : i32
    return %arg1, %c0_i32, %c0_i32_0 : i32, i32, i32
  }
  func.func @transform_5(%arg0: i32, %arg1: i32) -> (i32, i32) {
    %c0_i32 = arith.constant 0 : i32
    %c0_i32_0 = arith.constant 0 : i32
    %c0_i32_1 = arith.constant 0 : i32
    return %c0_i32, %c0_i32_0 : i32, i32
  }
  func.func @transform_6(%arg0: i32, %arg1: i32) -> (i32, i32, i32) {
    %c0_i32 = arith.constant 0 : i32
    %c0_i32_0 = arith.constant 0 : i32
    %c0_i32_1 = arith.constant 0 : i32
    return %arg0, %c0_i32, %c0_i32_0 : i32, i32, i32
  }
  func.func @transform_7(%arg0: i32, %arg1: i32) -> (i32, i32, i32, i32) {
    %c0_i32 = arith.constant 0 : i32
    %c0_i32_0 = arith.constant 0 : i32
    %c0_i32_1 = arith.constant 0 : i32
    return %arg0, %arg1, %c0_i32, %c0_i32_0 : i32, i32, i32, i32
  }
}

</mosaic_0001>

<llo_original>
// kernel: tpu_custom_call.1
$region0: #{tpu_custom_call.1}
  #allocation0 [shape = 'u32[]', space=smem, size = 0x4, offset = 0x4, fixed_abs, tag = 'smem constant byte address 0x4 - core index']
  #allocation1 [shape = 'u32[72,128]{1,0:T(1,128)}', space=vmem, size = 0x9000, scoped, tag = 'internal scratch']
  %s0 = inlined_call_operand.vmem [shape: f32[16,16], index: 0, kind: input, shape index: {}]
  %s1 = inlined_call_operand.vmem [shape: s32[16,8], index: 1, kind: input, shape index: {}]
  %s2 = inlined_call_operand.vmem [shape: bf16[2,16,32], index: 2, kind: input, shape index: {}]
  %s3 = inlined_call_operand.vmem [shape: bf16[3,4,32,8], index: 3, kind: input, shape index: {}]
  %s4 = inlined_call_operand.vmem [shape: bf16[4,8,32], index: 4, kind: input, shape index: {}]
  %s5 = inlined_call_operand.vmem [shape: f32[1,32], index: 5, kind: input, shape index: {}]
  %s6 = inlined_call_operand.hbm [shape: f32[2,16,32], index: 6, kind: output, shape index: {0}]
  %s7 = inlined_call_operand.vmem [shape: f32[2,4,16,8], index: 7, kind: output, shape index: {1}]
  %8 = xla_tuple %s6, %s7
  %s9 = sld [smem:[#allocation0]]
  $region114: #{tpu_custom_call.1} parent=0
    _
  %s11 = ssub.s32 1, %s9
  %s12 = scalar_select 0, %s11, %s9
  $region1: #{tpu_custom_call.1} parent=0
    #allocation2 [shape = 'u8[49152]{0}', space=vmem, size = 0xc000, scoped, tag = 'input window, operand 3']
    #allocation3 [shape = 'u8[16384]{0}', space=vmem, size = 0x4000, scoped, tag = 'output window, operand 0']
    #allocation4 [shape = 's32[2]{0}', space=sflag, size = 0x8, scoped, tag = 'scoped memory for tpu_custom_call.1']
    %13 = vsyncpa [#allocation4], 0
    %s14 = scalar_lea.sflag [#allocation4], 1
    %15 = vsyncpa %s14, 0
    loop: start=0, step=1, limit=10
    $region2: #{tpu_custom_call.1} parent=1 // loop_pre_header
      _
    $region3: #{tpu_custom_call.1} parent=1 // loop_header
      %s17 = sphi 0, %s21
      %p18 = scmp.ge.s32.totalorder %s17, 10
      %s24 = sphi 0, %s36
      %s25 = sphi 0, %s32
      %s26 = sphi 0, %s24
      %s27 = sphi 0, %s25
      %s28 = sphi 0, %s26
      %s29 = sphi 0, %s27
      %s37 = sphi 0, %s37
      %s39 = sphi 0, %s37
      %s40 = sphi 0, %s39
      %s54 = sphi 0, %s40
      %s58 = sphi 0, %s58
      %s60 = sphi 0, %s58
      %s61 = sphi 0, %s60
      %s75 = sphi 0, %s61
      %s81 = sphi 0, %s83
      %s84 = sphi 0, %s81
      %s85 = sphi 0, %s84
      %s101 = sphi 0, %s85
      %s107 = sphi 0, %s109
      %s110 = sphi 0, %s107
      %s111 = sphi 0, %s110
      %s127 = sphi 0, %s111
      %s133 = sphi 0, %s135
      %s136 = sphi 0, %s133
      %s137 = sphi 0, %s136
      %s153 = sphi 0, %s137
      %s157 = sphi 0, %s157
      %s159 = sphi 0, %s157
      %s160 = sphi 0, %s159
      %s174 = sphi 0, %s160
      %s180 = sphi 0, %s182
      %s183 = sphi 0, %s180
      %s184 = sphi 0, %s183
      %s200 = sphi 0, %s184
      %s208 = sphi 0, %s210
      %s211 = sphi 0, %s208
      %s212 = sphi 0, %s211
      %s228 = sphi 0, %s212
    $region4: #{tpu_custom_call.1} parent=1 // loop_header_branch
      %20 = sbr.rel (%p18) target = $region8
    $region5: #{tpu_custom_call.1} parent=1 // loop_body
      %s22 = ssub.s32 %s17, 1
      %s23 = ssub.s32 %s17, 2
      %s30 = sadd.s32 1, %s25
      %p31 = scmp.ge.s32.totalorder %s30, 4
      %s32 = scalar_select %p31, 0, %s30
      %s33 = sadd.s32 1, %s24
      %s34 = scalar_select %p31, %s33, %s24
      %p35 = scmp.ge.s32.totalorder %s34, 2
      %s36 = scalar_select %p35, 0, %s34
      %s38 = sadd.s32 %s37, 1
      %p41 = scmp.eq.s32.totalorder %s17, 7
      %p42 = scmp.ne.s32.totalorder %s37, %s39
      %p43 = scmp.eq.s32.totalorder %s17, 0
      %p44 = por %p42, %p43
      %p45 = scmp.ne.s32.totalorder %s37, %s39
      %p46 = scmp.eq.s32.totalorder %s22, 7
      %p47 = por %p45, %p46
      %p48 = scmp.ne.s32.totalorder %s39, %s40
      %p49 = scmp.eq.s32.totalorder %s22, 0
      %p50 = por %p48, %p49
      %p51 = scmp.ne.s32.totalorder %s39, %s40
      %p52 = scmp.eq.s32.totalorder %s23, 7
      %p53 = por %p51, %p52
      %p55 = scmp.ne.s32.totalorder %s40, %s54
      %p56 = scmp.eq.s32.totalorder %s23, 0
      %p57 = por %p55, %p56
      %s59 = sadd.s32 %s58, 1
      %p62 = scmp.eq.s32.totalorder %s17, 7
      %p63 = scmp.ne.s32.totalorder %s58, %s60
      %p64 = scmp.eq.s32.totalorder %s17, 0
      %p65 = por %p63, %p64
      %p66 = scmp.ne.s32.totalorder %s58, %s60
      %p67 = scmp.eq.s32.totalorder %s22, 7
      %p68 = por %p66, %p67
      %p69 = scmp.ne.s32.totalorder %s60, %s61
      %p70 = scmp.eq.s32.totalorder %s22, 0
      %p71 = por %p69, %p70
      %p72 = scmp.ne.s32.totalorder %s60, %s61
      %p73 = scmp.eq.s32.totalorder %s23, 7
      %p74 = por %p72, %p73
      %p76 = scmp.ne.s32.totalorder %s61, %s75
      %p77 = scmp.eq.s32.totalorder %s23, 0
      %p78 = por %p76, %p77
      %s79 = ssub.s32 %s24, %s36
      %p80 = scmp.eq.s32.totalorder %s79, 0
      %s82 = sadd.s32 %s81, 1
      %s83 = scalar_select %p80, %s81, %s82
      %p86 = pneg %p80
      %p87 = scmp.eq.s32.totalorder %s17, 7
      %p88 = por %p86, %p87
      %p89 = scmp.ne.s32.totalorder %s81, %s84
      %p90 = scmp.eq.s32.totalorder %s17, 0
      %p91 = por %p89, %p90
      %p92 = scmp.ne.s32.totalorder %s81, %s84
      %p93 = scmp.eq.s32.totalorder %s22, 7
      %p94 = por %p92, %p93
      %p95 = scmp.ne.s32.totalorder %s84, %s85
      %p96 = scmp.eq.s32.totalorder %s22, 0
      %p97 = por %p95, %p96
      %p98 = scmp.ne.s32.totalorder %s84, %s85
      %p99 = scmp.eq.s32.totalorder %s23, 7
      %p100 = por %p98, %p99
      %p102 = scmp.ne.s32.totalorder %s85, %s101
      %p103 = scmp.eq.s32.totalorder %s23, 0
      %p104 = por %p102, %p103
      %s105 = ssub.s32 %s25, %s32
      %p106 = scmp.eq.s32.totalorder %s105, 0
      %s108 = sadd.s32 %s107, 1
      %s109 = scalar_select %p106, %s107, %s108
      %p112 = pneg %p106
      %p113 = scmp.eq.s32.totalorder %s17, 7
      %p114 = por %p112, %p113
      %p115 = scmp.ne.s32.totalorder %s107, %s110
      %p116 = scmp.eq.s32.totalorder %s17, 0
      %p117 = por %p115, %p116
      %p118 = scmp.ne.s32.totalorder %s107, %s110
      %p119 = scmp.eq.s32.totalorder %s22, 7
      %p120 = por %p118, %p119
      %p121 = scmp.ne.s32.totalorder %s110, %s111
      %p122 = scmp.eq.s32.totalorder %s22, 0
      %p123 = por %p121, %p122
      %p124 = scmp.ne.s32.totalorder %s110, %s111
      %p125 = scmp.eq.s32.totalorder %s23, 7
      %p126 = por %p124, %p125
      %p128 = scmp.ne.s32.totalorder %s111, %s127
      %p129 = scmp.eq.s32.totalorder %s23, 0
      %p130 = por %p128, %p129
      %s131 = ssub.s32 %s25, %s32
      %p132 = scmp.eq.s32.totalorder %s131, 0
      %s134 = sadd.s32 %s133, 1
      %s135 = scalar_select %p132, %s133, %s134
      %p138 = pneg %p132
      %p139 = scmp.eq.s32.totalorder %s17, 7
      %p140 = por %p138, %p139
      %p141 = scmp.ne.s32.totalorder %s133, %s136
      %p142 = scmp.eq.s32.totalorder %s17, 0
      %p143 = por %p141, %p142
      %p144 = scmp.ne.s32.totalorder %s133, %s136
      %p145 = scmp.eq.s32.totalorder %s22, 7
      %p146 = por %p144, %p145
      %p147 = scmp.ne.s32.totalorder %s136, %s137
      %p148 = scmp.eq.s32.totalorder %s22, 0
      %p149 = por %p147, %p148
      %p150 = scmp.ne.s32.totalorder %s136, %s137
      %p151 = scmp.eq.s32.totalorder %s23, 7
      %p152 = por %p150, %p151
      %p154 = scmp.ne.s32.totalorder %s137, %s153
      %p155 = scmp.eq.s32.totalorder %s23, 0
      %p156 = por %p154, %p155
      %s158 = sadd.s32 %s157, 1
      %p161 = scmp.eq.s32.totalorder %s17, 7
      %p162 = scmp.ne.s32.totalorder %s157, %s159
      %p163 = scmp.eq.s32.totalorder %s17, 0
      %p164 = por %p162, %p163
      %p165 = scmp.ne.s32.totalorder %s157, %s159
      %p166 = scmp.eq.s32.totalorder %s22, 7
      %p167 = por %p165, %p166
      %p168 = scmp.ne.s32.totalorder %s159, %s160
      %p169 = scmp.eq.s32.totalorder %s22, 0
      %p170 = por %p168, %p169
      %p171 = scmp.ne.s32.totalorder %s159, %s160
      %p172 = scmp.eq.s32.totalorder %s23, 7
      %p173 = por %p171, %p172
      %p175 = scmp.ne.s32.totalorder %s160, %s174
      %p176 = scmp.eq.s32.totalorder %s23, 0
      %p177 = por %p175, %p176
      %s178 = ssub.s32 %s24, %s36
      %p179 = scmp.eq.s32.totalorder %s178, 0
      %s181 = sadd.s32 %s180, 1
      %s182 = scalar_select %p179, %s180, %s181
      %p185 = pneg %p179
      %p186 = scmp.eq.s32.totalorder %s17, 7
      %p187 = por %p185, %p186
      %p188 = scmp.ne.s32.totalorder %s180, %s183
      %p189 = scmp.eq.s32.totalorder %s17, 0
      %p190 = por %p188, %p189
      %p191 = scmp.ne.s32.totalorder %s180, %s183
      %p192 = scmp.eq.s32.totalorder %s22, 7
      %p193 = por %p191, %p192
      %p194 = scmp.ne.s32.totalorder %s183, %s184
      %p195 = scmp.eq.s32.totalorder %s22, 0
      %p196 = por %p194, %p195
      %p197 = scmp.ne.s32.totalorder %s183, %s184
      %p198 = scmp.eq.s32.totalorder %s23, 7
      %p199 = por %p197, %p198
      %p201 = scmp.ne.s32.totalorder %s184, %s200
      %p202 = scmp.eq.s32.totalorder %s23, 0
      %p203 = por %p201, %p202
      %s204 = ssub.s32 %s24, %s36
      %s205 = ssub.s32 %s25, %s32
      %s206 = sor.u32 %s204, %s205
      %p207 = scmp.eq.s32.totalorder %s206, 0
      %s209 = sadd.s32 %s208, 1
      %s210 = scalar_select %p207, %s208, %s209
      %p213 = pneg %p207
      %p214 = scmp.eq.s32.totalorder %s17, 7
      %p215 = por %p213, %p214
      %p216 = scmp.ne.s32.totalorder %s208, %s211
      %p217 = scmp.eq.s32.totalorder %s17, 0
      %p218 = por %p216, %p217
      %p219 = scmp.ne.s32.totalorder %s208, %s211
      %p220 = scmp.eq.s32.totalorder %s22, 7
      %p221 = por %p219, %p220
      %p222 = scmp.ne.s32.totalorder %s211, %s212
      %p223 = scmp.eq.s32.totalorder %s22, 0
      %p224 = por %p222, %p223
      %p225 = scmp.ne.s32.totalorder %s211, %s212
      %p226 = scmp.eq.s32.totalorder %s23, 7
      %p227 = por %p225, %p226
      %p229 = scmp.ne.s32.totalorder %s212, %s228
      %p230 = scmp.eq.s32.totalorder %s23, 0
      %p231 = por %p229, %p230
      %p232 = scmp.le.s32.totalorder 1, %s17
      %p233 = scmp.lt.s32.totalorder %s17, 9
      %p234 = pnand %p232, %p233
      %p235 = pneg %p234
      // Predicated region
      $region9: #{tpu_custom_call.1} parent=5 // pred_check
        _
      $region10: #{tpu_custom_call.1} parent=5 // pred_check_branch
        %237 = sbr.rel (%p234) target = $region12
      $region11: #{tpu_custom_call.1} parent=5 // pred_region
        %s238 = ssub.s32 %s17, 1
        // Predicated region
        $region13: #{tpu_custom_call.1} parent=11 // pred_check
          %p239 = pneg %p50
        $region14: #{tpu_custom_call.1} parent=11 // pred_check_branch
          %241 = sbr.rel (%p239) target = $region16
        $region15: #{tpu_custom_call.1} parent=11 // pred_region
          _
        $region16: #{tpu_custom_call.1} parent=11 // pred_fallthru
          _
        // Predicated region
        $region17: #{tpu_custom_call.1} parent=11 // pred_check
          %p242 = pneg %p71
        $region18: #{tpu_custom_call.1} parent=11 // pred_check_branch
          %244 = sbr.rel (%p242) target = $region20
        $region19: #{tpu_custom_call.1} parent=11 // pred_region
          _
        $region20: #{tpu_custom_call.1} parent=11 // pred_fallthru
          _
        // Predicated region
        $region21: #{tpu_custom_call.1} parent=11 // pred_check
          %p245 = pneg %p170
        $region22: #{tpu_custom_call.1} parent=11 // pred_check_branch
          %247 = sbr.rel (%p245) target = $region24
        $region23: #{tpu_custom_call.1} parent=11 // pred_region
          _
        $region24: #{tpu_custom_call.1} parent=11 // pred_fallthru
          _
      $region12: #{tpu_custom_call.1} parent=5 // pred_fallthru
        _
      %p248 = scmp.lt.s32.totalorder %s17, 8
      // Predicated region
      $region25: #{tpu_custom_call.1} parent=5 // pred_check
        %p249 = pneg %p248
      $region26: #{tpu_custom_call.1} parent=5 // pred_check_branch
        %251 = sbr.rel (%p249) target = $region28
      $region27: #{tpu_custom_call.1} parent=5 // pred_region
        // Predicated region
        $region29: #{tpu_custom_call.1} parent=27 // pred_check
          %p252 = pneg %p91
        $region30: #{tpu_custom_call.1} parent=27 // pred_check_branch
          %254 = sbr.rel (%p252) target = $region32
        $region31: #{tpu_custom_call.1} parent=27 // pred_region
          %p255 = scmp.lt.s32.totalorder %s24, 1
          %s256 = scalar_select %p255, %s24, 1
          %s257 = smul.addr %s256, 2
          %s258 = smul.addr %s257, 4
          %s259 = scalar_lea.vmem %s2, %s258
        $region32: #{tpu_custom_call.1} parent=27 // pred_fallthru
          _
        // Predicated region
        $region33: #{tpu_custom_call.1} parent=27 // pred_check
          %p260 = pneg %p117
        $region34: #{tpu_custom_call.1} parent=27 // pred_check_branch
          %262 = sbr.rel (%p260) target = $region36
        $region35: #{tpu_custom_call.1} parent=27 // pred_region
          %s263 = sand.u32 %s107, 1
          %s264 = sand.u32 %s107, 1
          %s265 = smul.addr %s264, 48
          %s266 = scalar_lea.vmem [#allocation2], %s265
          %s267 = smul.addr %s25, 4
          %s268 = smul.addr %s267, 4
          %s269 = scalar_lea.vmem %s3, %s268
          // Predicated region
          $region37: #{tpu_custom_call.1} parent=35 // pred_check
            _
          $region38: #{tpu_custom_call.1} parent=35 // pred_check_branch
            %271 = sbr.rel (0) target = $region40
          $region39: #{tpu_custom_call.1} parent=35 // pred_region
            // Predicated region
            $region41: #{tpu_custom_call.1} parent=39 // pred_check
              _
            $region42: #{tpu_custom_call.1} parent=39 // pred_check_branch
              %273 = sbr.rel target = $region44
            $region43: #{tpu_custom_call.1} parent=39 // pred_region
              // Predicated region
              $region56: #{tpu_custom_call.1} parent=43 // pred_check
                _
              $region57: #{tpu_custom_call.1} parent=43 // pred_check_branch
                %311 = sbr.rel (0) target = $region59
              $region58: #{tpu_custom_call.1} parent=43 // pred_region
                loop: start=0, step=1, limit=1
                $region60: #{tpu_custom_call.1} parent=58 // loop_pre_header
                  _
                $region61: #{tpu_custom_call.1} parent=58 // loop_header
                  %s313 = sphi 0, %s317
                  %p314 = scmp.ge.s32.totalorder %s313, 1
                  %s318 = sphi %s269, %s269
                  %s319 = sphi %s266, %s266
                $region62: #{tpu_custom_call.1} parent=58 // loop_header_branch
                  %316 = sbr.rel (%p314) target = $region66
                $region63: #{tpu_custom_call.1} parent=58 // loop_body
                  _
                $region64: #{tpu_custom_call.1} parent=58 // loop_footer
                  %s317 = sadd.s32 1, %s313
                $region65: #{tpu_custom_call.1} parent=58 // loop_footer_branch
                  %312 = sbr.rel target = $region61
                $region66: #{tpu_custom_call.1} parent=58 // loop_exit
                  _
                %s321 = ssub.s32 16, 1
                loop: start=0, step=1, limit=1
                $region67: #{tpu_custom_call.1} parent=58 // loop_pre_header
                  _
                $region68: #{tpu_custom_call.1} parent=58 // loop_header
                  %s323 = sphi 0, %s327
                  %p324 = scmp.ge.s32.totalorder %s323, 1
                  %s328 = sphi %s269, %s269
                  %s329 = sphi %s266, %s266
                $region69: #{tpu_custom_call.1} parent=58 // loop_header_branch
                  %326 = sbr.rel (%p324) target = $region73
                $region70: #{tpu_custom_call.1} parent=58 // loop_body
                  %v330 = vld [vmem:[%s328] sm:%s321]
                  %331 = vst [vmem:[%s329] sm:%s321] %v330
                  %v332 = vld [vmem:[%s328 + $0x4] sm:%s321]
                  %333 = vst [vmem:[%s329 + $0x4] sm:%s321] %v332
                  %v334 = vld [vmem:[%s328 + $0x8] sm:%s321]
                  %335 = vst [vmem:[%s329 + $0x8] sm:%s321] %v334
                  %v336 = vld [vmem:[%s328 + $0xc] sm:%s321]
                  %337 = vst [vmem:[%s329 + $0xc] sm:%s321] %v336
                  %v338 = vld [vmem:[%s328 + $0x40] sm:%s321]
                  %339 = vst [vmem:[%s329 + $0x10] sm:%s321] %v338
                  %v340 = vld [vmem:[%s328 + $0x44] sm:%s321]
                  %341 = vst [vmem:[%s329 + $0x14] sm:%s321] %v340
                  %v342 = vld [vmem:[%s328 + $0x48] sm:%s321]
                  %343 = vst [vmem:[%s329 + $0x18] sm:%s321] %v342
                  %v344 = vld [vmem:[%s328 + $0x4c] sm:%s321]
                  %345 = vst [vmem:[%s329 + $0x1c] sm:%s321] %v344
                  %v346 = vld [vmem:[%s328 + $0x80] sm:%s321]
                  %347 = vst [vmem:[%s329 + $0x20] sm:%s321] %v346
                  %v348 = vld [vmem:[%s328 + $0x84] sm:%s321]
                  %349 = vst [vmem:[%s329 + $0x24] sm:%s321] %v348
                  %v350 = vld [vmem:[%s328 + $0x88] sm:%s321]
                  %351 = vst [vmem:[%s329 + $0x28] sm:%s321] %v350
                  %v352 = vld [vmem:[%s328 + $0x8c] sm:%s321]
                  %353 = vst [vmem:[%s329 + $0x2c] sm:%s321] %v352
                $region71: #{tpu_custom_call.1} parent=58 // loop_footer
                  %s327 = sadd.s32 1, %s323
                $region72: #{tpu_custom_call.1} parent=58 // loop_footer_branch
                  %322 = sbr.rel target = $region68
                $region73: #{tpu_custom_call.1} parent=58 // loop_exit
                  _
              $region59: #{tpu_custom_call.1} parent=43 // pred_fallthru
                _
            $region44: #{tpu_custom_call.1} parent=39 // pred_fallthru
              _
            // Predicated region
            $region45: #{tpu_custom_call.1} parent=39 // pred_check
              _
            $region46: #{tpu_custom_call.1} parent=39 // pred_check_branch
              %275 = sbr.rel (0) target = $region48
            $region47: #{tpu_custom_call.1} parent=39 // pred_region
              %s277 = ssub.s32 16, 1
              loop: start=0, step=1, limit=1
              $region49: #{tpu_custom_call.1} parent=47 // loop_pre_header
                _
              $region50: #{tpu_custom_call.1} parent=47 // loop_header
                %s279 = sphi 0, %s283
                %p280 = scmp.ge.s32.totalorder %s279, 1
                %s284 = sphi %s269, %s269
                %s285 = sphi %s266, %s266
              $region51: #{tpu_custom_call.1} parent=47 // loop_header_branch
                %282 = sbr.rel (%p280) target = $region55
              $region52: #{tpu_custom_call.1} parent=47 // loop_body
                %v286 = vld [vmem:[%s284] sm:%s277]
                %287 = vst [vmem:[%s285] sm:%s277] %v286
                %v288 = vld [vmem:[%s284 + $0x4] sm:%s277]
                %289 = vst [vmem:[%s285 + $0x4] sm:%s277] %v288
                %v290 = vld [vmem:[%s284 + $0x8] sm:%s277]
                %291 = vst [vmem:[%s285 + $0x8] sm:%s277] %v290
                %v292 = vld [vmem:[%s284 + $0xc] sm:%s277]
                %293 = vst [vmem:[%s285 + $0xc] sm:%s277] %v292
                %v294 = vld [vmem:[%s284 + $0x40] sm:%s277]
                %295 = vst [vmem:[%s285 + $0x10] sm:%s277] %v294
                %v296 = vld [vmem:[%s284 + $0x44] sm:%s277]
                %297 = vst [vmem:[%s285 + $0x14] sm:%s277] %v296
                %v298 = vld [vmem:[%s284 + $0x48] sm:%s277]
                %299 = vst [vmem:[%s285 + $0x18] sm:%s277] %v298
                %v300 = vld [vmem:[%s284 + $0x4c] sm:%s277]
                %301 = vst [vmem:[%s285 + $0x1c] sm:%s277] %v300
                %v302 = vld [vmem:[%s284 + $0x80] sm:%s277]
                %303 = vst [vmem:[%s285 + $0x20] sm:%s277] %v302
                %v304 = vld [vmem:[%s284 + $0x84] sm:%s277]
                %305 = vst [vmem:[%s285 + $0x24] sm:%s277] %v304
                %v306 = vld [vmem:[%s284 + $0x88] sm:%s277]
                %307 = vst [vmem:[%s285 + $0x28] sm:%s277] %v306
                %v308 = vld [vmem:[%s284 + $0x8c] sm:%s277]
                %309 = vst [vmem:[%s285 + $0x2c] sm:%s277] %v308
              $region53: #{tpu_custom_call.1} parent=47 // loop_footer
                %s283 = sadd.s32 1, %s279
              $region54: #{tpu_custom_call.1} parent=47 // loop_footer_branch
                %278 = sbr.rel target = $region50
              $region55: #{tpu_custom_call.1} parent=47 // loop_exit
                _
            $region48: #{tpu_custom_call.1} parent=39 // pred_fallthru
              _
          $region40: #{tpu_custom_call.1} parent=35 // pred_fallthru
            _
          %354 = vnop
        $region36: #{tpu_custom_call.1} parent=27 // pred_fallthru
          _
        // Predicated region
        $region74: #{tpu_custom_call.1} parent=27 // pred_check
          %p355 = pneg %p143
        $region75: #{tpu_custom_call.1} parent=27 // pred_check_branch
          %357 = sbr.rel (%p355) target = $region77
        $region76: #{tpu_custom_call.1} parent=27 // pred_region
          %p358 = scmp.lt.s32.totalorder %s25, 3
          %s359 = scalar_select %p358, %s25, 3
          %s360 = smul.addr %s359, 4
          %s361 = scalar_lea.vmem %s4, %s360
        $region77: #{tpu_custom_call.1} parent=27 // pred_fallthru
          _
      $region28: #{tpu_custom_call.1} parent=5 // pred_fallthru
        _
      %p362 = scmp.le.s32.totalorder 1, %s17
      %p363 = scmp.lt.s32.totalorder %s17, 9
      %p364 = pnand %p362, %p363
      %p365 = pneg %p364
      // Predicated region
      $region78: #{tpu_custom_call.1} parent=5 // pred_check
        _
      $region79: #{tpu_custom_call.1} parent=5 // pred_check_branch
        %367 = sbr.rel (%p364) target = $region81
      $region80: #{tpu_custom_call.1} parent=5 // pred_region
        %s368 = ssub.s32 %s17, 1
        %s369 = sand.u32 %s110, 1
        %s370 = sand.u32 %s110, 1
        %s371 = smul.addr %s370, 48
        %s372 = scalar_lea.vmem [#allocation2], %s371
        // Predicated region
        $region82: #{tpu_custom_call.1} parent=80 // pred_check
          %p373 = pneg %p123
        $region83: #{tpu_custom_call.1} parent=80 // pred_check_branch
          %375 = sbr.rel (%p373) target = $region85
        $region84: #{tpu_custom_call.1} parent=80 // pred_region
          _
        $region85: #{tpu_custom_call.1} parent=80 // pred_fallthru
          _
        %p376 = pneg %p50
        %p377 = pneg %p47
        %p378 = pneg %p71
        %p379 = pneg %p68
        %p380 = scmp.lt.s32.totalorder %s26, 1
        %s381 = scalar_select %p380, %s26, 1
        %s382 = smul.addr %s381, 2
        %s383 = smul.addr %s382, 4
        %s384 = scalar_lea.vmem %s2, %s383
        %p385 = pneg %p97
        %p386 = pneg %p94
        %s387 = sand.u32 %s110, 1
        %s388 = sand.u32 %s110, 1
        %s389 = smul.addr %s388, 48
        %s390 = scalar_lea.vmem [#allocation2], %s389
        %p391 = pneg %p123
        %p392 = pneg %p120
        %p393 = scmp.lt.s32.totalorder %s27, 3
        %s394 = scalar_select %p393, %s27, 3
        %s395 = smul.addr %s394, 4
        %s396 = scalar_lea.vmem %s4, %s395
        %p397 = pneg %p149
        %p398 = pneg %p146
        %p399 = pneg %p170
        %p400 = pneg %p167
        %p401 = pneg %p196
        %p402 = pneg %p193
        %s403 = sand.u32 %s183, 1
        %s404 = scalar_lea.sflag [#allocation4], %s403
        %s405 = sand.u32 %s183, 1
        %s406 = smul.addr %s405, 16
        %s407 = scalar_lea.vmem [#allocation3], %s406
        %p408 = pneg %p224
        %p409 = pneg %p221
        %p410 = scmp.lt.s32.totalorder %s26, 1
        %s411 = scalar_select %p410, %s26, 1
        %p412 = scmp.lt.s32.totalorder %s27, 3
        %s413 = scalar_select %p412, %s27, 3
        %s414 = smul.addr %s413, 2
        %s415 = smul.addr %s411, 8
        %s416 = sadd.s32 %s414, %s415
        %s417 = smul.addr %s416, 8
        %s418 = scalar_lea.vmem %s7, %s417
        %p419 = scmp.lt.s32.totalorder %s26, 1
        %s420 = scalar_select %p419, %s26, 1
        %s421 = smul.addr %s420, 2
        %s422 = smul.addr %s421, 4
        %s423 = scalar_lea.vmem %s2, %s422
        %p424 = scmp.lt.s32.totalorder %s27, 3
        %s425 = scalar_select %p424, %s27, 3
        %s426 = smul.addr %s425, 4
        %s427 = scalar_lea.vmem %s4, %s426
        %p428 = scmp.lt.s32.totalorder %s26, 1
        %s429 = scalar_select %p428, %s26, 1
        %p430 = scmp.lt.s32.totalorder %s27, 3
        %s431 = scalar_select %p430, %s27, 3
        %s432 = smul.addr %s431, 2
        %s433 = smul.addr %s429, 8
        %s434 = sadd.s32 %s432, %s433
        %s435 = smul.addr %s434, 8
        %s436 = scalar_lea.vmem %s7, %s435
        %v438 = vld [vmem:[%s423] sm:$0xf]
        %v439 = vld [vmem:[%s423 + $0x4] sm:$0xf]
        %v440 = vld [vmem:[%s372] sm:$0xf]
        %v441 = vld [vmem:[%s372 + $0x4] sm:$0xf]
        %v442 = vld [vmem:[%s372 + $0x8] sm:$0xf]
        %v443 = vld [vmem:[%s372 + $0xc] sm:$0xf]
        %v446 = vunpack.c.l.b16 %v438
        %v447 = vunpack.c.l.b16 %v439
        %v448 = vpack.c.b16 %v447, %v446
        %v453 = vunpack.c.l.b16 %v440
        %v454 = vunpack.c.l.b16 %v441
        %v455 = vunpack.c.l.b16 %v442
        %v456 = vunpack.c.l.b16 %v443
        %v457 = vpack.c.b16 %v454, %v453
        %v458 = vpack.c.b16 %v456, %v455
        %vm461 = vcmask 261120
        %v463 = vsel %vm461, %v448, 0
        %465 = vmatpush.bf16.msra.mxu0 0
        %466 = vmatpush.bf16.msra.mxu0 0
        %467 = vmatpush.bf16.msra.mxu0 0
        %468 = vmatpush.bf16.msra.mxu0 0
        %469 = vmatpush.bf16.msra.mxu0 0
        %470 = vmatpush.bf16.msra.mxu0 0
        %471 = vmatpush.bf16.msra.mxu0 %v458
        %472 = vmatpush.bf16.msra.mxu0 %v457
        %473 = vmatmul.bf16.gmra.mxu0 %v463
        %v474 = vpop.f32.mrf.mxu0
        %v475 = vadd.f32 0.0, %v474
        %v476 = vpop.f32.mrf.mxu0
        %v477 = vadd.f32 0.0, %v476
        %478 = vdwg.mxu0
        %s479 = scalar_lea.vmem %s372, 16 [#allocation2]
        %v480 = vld [vmem:[%s479] sm:$0xf]
        %v481 = vld [vmem:[%s479 + $0x4] sm:$0xf]
        %v482 = vld [vmem:[%s479 + $0x8] sm:$0xf]
        %v483 = vld [vmem:[%s479 + $0xc] sm:$0xf]
        %v488 = vunpack.c.l.b16 %v480
        %v489 = vunpack.c.l.b16 %v481
        %v490 = vunpack.c.l.b16 %v482
        %v491 = vunpack.c.l.b16 %v483
        %v492 = vpack.c.b16 %v489, %v488
        %v493 = vpack.c.b16 %v491, %v490
        %496 = vmatpush.bf16.msra.mxu0 0
        %497 = vmatpush.bf16.msra.mxu0 0
        %498 = vmatpush.bf16.msra.mxu0 0
        %499 = vmatpush.bf16.msra.mxu0 0
        %500 = vmatpush.bf16.msra.mxu0 0
        %501 = vmatpush.bf16.msra.mxu0 0
        %502 = vmatpush.bf16.msra.mxu0 %v493
        %503 = vmatpush.bf16.msra.mxu0 %v492
        %504 = vmatmul.bf16.gmra.mxu0 %v463
        %v505 = vpop.f32.mrf.mxu0
        %v506 = vadd.f32 0.0, %v505
        %v507 = vpop.f32.mrf.mxu0
        %v508 = vadd.f32 0.0, %v507
        %509 = vdwg.mxu0
        %s510 = scalar_lea.vmem %s372, 32 [#allocation2]
        %v511 = vld [vmem:[%s510] sm:$0xf]
        %v512 = vld [vmem:[%s510 + $0x4] sm:$0xf]
        %v513 = vld [vmem:[%s510 + $0x8] sm:$0xf]
        %v514 = vld [vmem:[%s510 + $0xc] sm:$0xf]
        %v519 = vunpack.c.l.b16 %v511
        %v520 = vunpack.c.l.b16 %v512
        %v521 = vunpack.c.l.b16 %v513
        %v522 = vunpack.c.l.b16 %v514
        %v523 = vpack.c.b16 %v520, %v519
        %v524 = vpack.c.b16 %v522, %v521
        %527 = vmatpush.bf16.msra.mxu0 0
        %528 = vmatpush.bf16.msra.mxu0 0
        %529 = vmatpush.bf16.msra.mxu0 0
        %530 = vmatpush.bf16.msra.mxu0 0
        %531 = vmatpush.bf16.msra.mxu0 0
        %532 = vmatpush.bf16.msra.mxu0 0
        %533 = vmatpush.bf16.msra.mxu0 %v524
        %534 = vmatpush.bf16.msra.mxu0 %v523
        %535 = vmatmul.bf16.gmra.mxu0 %v463
        %v536 = vpop.f32.mrf.mxu0
        %v537 = vadd.f32 0.0, %v536
        %v538 = vpop.f32.mrf.mxu0
        %v539 = vadd.f32 0.0, %v538
        %540 = vdwg.mxu0
        %v541 = vmul.f32 %v475, 0.35355338
        %v542 = vmul.f32 %v477, 0.35355338
        %v543 = vpack.c.bf16 %v542, %v541
        %v544 = vpack.c.bf16 %v508, %v506
        %vm545 = vcmask 64512
        %v547 = vsel %vm545, %v543, 0
        %v550 = vsel %vm545, %v544, 0
        %552 = vmatpush.bf16.xpose.msra.mxu0 0
        %553 = vmatpush.bf16.xpose.msra.mxu0 0
        %554 = vmatpush.bf16.xpose.msra.mxu0 0
        %555 = vmatpush.bf16.xpose.msra.mxu0 0
        %556 = vmatpush.bf16.xpose.msra.mxu0 0
        %557 = vmatpush.bf16.xpose.msra.mxu0 0
        %558 = vmatpush.bf16.xpose.msra.mxu0 0
        %559 = vmatpush.bf16.xpose.msra.mxu0 %v550
        %560 = vmatmul.bf16.gmra.mxu0 %v547
        %v561 = vpop.f32.mrf.mxu0
        %v562 = vadd.f32 0.0, %v561
        %v563 = vpop.f32.mrf.mxu0
        %v564 = vadd.f32 0.0, %v563
        %565 = vdwg.mxu0
        %v566 = vld [vmem:[%s0] sm:$0xff]
        %v567 = vld [vmem:[%s0 + $0x8] sm:$0xff]
        %vm568 = vcmp.gt.f32.partialorder %v566, 0.0
        %vm569 = vcmp.gt.f32.partialorder %v567, 0.0
        %v570 = vsel %vm568, %v562, -1e+30
        %v571 = vsel %vm569, %v564, -1e+30
        %vm572 = vcmask 130048
        %v573 = vsel %vm572, %v570, -inf
        %574 = vmax.xlane.f32.xlu0 %v573
        %v575 = vpop.xlane.xlu0 %574
        %v576 = vsel %vm572, %v571, -inf
        %577 = vmax.xlane.f32.xlu0 %v576
        %v578 = vpop.xlane.xlu0 %577
        %v579 = vsub.f32 %v570, %v575
        %v580 = vsub.f32 %v571, %v578
        %v581 = vmul.f32 %v579, 1.442695
        %v582 = vpow.pop %v581
        %v583 = vmul.f32 %v580, 1.442695
        %v584 = vpow.pop %v583
        %v585 = vmul.f32 %v566, %v582
        %v586 = vmul.f32 %v567, %v584
        %v587 = vsel %vm572, %v585, 0.0
        %588 = vadd.xlane.f32.xlu0 %v587
        %v589 = vpop.xlane.xlu0 %588
        %v590 = vsel %vm572, %v586, 0.0
        %591 = vadd.xlane.f32.xlu0 %v590
        %v592 = vpop.xlane.xlu0 %591
        %v593 = vrcp.pop %v589
        %v594 = vrcp.pop %v592
        %v595 = vmul.f32 %v585, %v593
        %v596 = vmul.f32 %v586, %v594
        %v597 = vpack.c.bf16 %v596, %v595
        %v598 = vpack.c.bf16 %v539, %v537
        %v600 = vsel %vm572, %v597, 0
        %602 = vmatpush.bf16.msra.mxu0 0
        %603 = vmatpush.bf16.msra.mxu0 0
        %604 = vmatpush.bf16.msra.mxu0 0
        %605 = vmatpush.bf16.msra.mxu0 0
        %606 = vmatpush.bf16.msra.mxu0 0
        %607 = vmatpush.bf16.msra.mxu0 0
        %608 = vmatpush.bf16.msra.mxu0 0
        %609 = vmatpush.bf16.msra.mxu0 %v598
        %610 = vmatmul.bf16.gmra.mxu0 %v600
        %v611 = vpop.f32.mrf.mxu0
        %v612 = vadd.f32 0.0, %v611
        %v613 = vpop.f32.mrf.mxu0
        %v614 = vadd.f32 0.0, %v613
        %615 = vdwg.mxu0
        %v616 = vpack.c.bf16 %v614, %v612
        %v617 = vld [vmem:[%s427] sm:$0xf]
        %v619 = vsel %vm545, %v616, 0
        %vm621 = vcmask 1043456
        %v623 = vsel %vm621, %v617, 0
        %625 = vmatpush.bf16.msra.mxu0 0
        %626 = vmatpush.bf16.msra.mxu0 0
        %627 = vmatpush.bf16.msra.mxu0 0
        %628 = vmatpush.bf16.msra.mxu0 0
        %629 = vmatpush.bf16.msra.mxu0 0
        %630 = vmatpush.bf16.msra.mxu0 0
        %631 = vmatpush.bf16.msra.mxu0 0
        %632 = vmatpush.bf16.msra.mxu0 %v623
        %633 = vmatmul.bf16.gmra.mxu0 %v619
        %v634 = vpop.f32.mrf.mxu0
        %v635 = vadd.f32 0.0, %v634
        %v636 = vpop.f32.mrf.mxu0
        %v637 = vadd.f32 0.0, %v636
        %638 = vdwg.mxu0
        %p639 = scmp.eq.s32.totalorder %s27, 0
        // Predicated region
        $region86: #{tpu_custom_call.1} parent=80 // pred_check
          %p640 = pneg %p639
        $region87: #{tpu_custom_call.1} parent=80 // pred_check_branch
          %642 = sbr.rel (%p640) target = $region89
        $region88: #{tpu_custom_call.1} parent=80 // pred_region
          %v643 = vld [vmem:[%s5] sm:$0x1]
          %v645 = vperm.slane %v643, 0
          %v647 = vadd.f32 %v645, %v635
          %v648 = vadd.f32 %v645, %v637
          %649 = vst.msk [vmem:[%s407] sm:$0xff] %vm461, %v647
          %650 = vst.msk [vmem:[%s407 + $0x8] sm:$0xff] %vm461, %v648
        $region89: #{tpu_custom_call.1} parent=80 // pred_fallthru
          _
        %p651 = scmp.ne.s32.totalorder %s27, 0
        // Predicated region
        $region90: #{tpu_custom_call.1} parent=80 // pred_check
          %p652 = pneg %p651
        $region91: #{tpu_custom_call.1} parent=80 // pred_check_branch
          %654 = sbr.rel (%p652) target = $region93
        $region92: #{tpu_custom_call.1} parent=80 // pred_region
          %v655 = vld [vmem:[%s407] sm:$0xff]
          %v656 = vld [vmem:[%s407 + $0x8] sm:$0xff]
          %v657 = vadd.f32 %v655, %v635
          %v658 = vadd.f32 %v656, %v637
          %659 = vst.msk [vmem:[%s407] sm:$0xff] %vm461, %v657
          %660 = vst.msk [vmem:[%s407 + $0x8] sm:$0xff] %vm461, %v658
        $region93: #{tpu_custom_call.1} parent=80 // pred_fallthru
          _
        %v661 = vld [vmem:[%s1] sm:$0xff]
        %v662 = vld [vmem:[%s1 + $0x8] sm:$0xff]
        %v663 = vlaneseq
        %v664 = vand.u32 %v663, 127
        %665 = vset.pattern.permute.xlu0 0
        %666 = vperm.xlu0 %665, %v661
        %v667 = vpop.permute.xlu0 %666
        %668 = vset.pattern.permute.xlu0 0
        %669 = vperm.xlu0 %668, %v662
        %v670 = vpop.permute.xlu0 %669
        %vm671 = vcmp.eq.s32.totalorder %v664, %v667
        %vm672 = vcmp.eq.s32.totalorder %v664, %v670
        %v673 = vsel %vm671, %v582, 0.0
        %v674 = vsel %vm672, %v584, 0.0
        %v675 = vsel %vm572, %v673, 0.0
        %676 = vadd.xlane.f32.xlu0 %v675
        %v677 = vpop.xlane.xlu0 %676
        %v678 = vsel %vm572, %v674, 0.0
        %679 = vadd.xlane.f32.xlu0 %v678
        %v680 = vpop.xlane.xlu0 %679
        %681 = vset.pattern.permute.xlu0 1
        %682 = vperm.xlu0 %681, %v661
        %v683 = vpop.permute.xlu0 %682
        %684 = vset.pattern.permute.xlu0 1
        %685 = vperm.xlu0 %684, %v662
        %v686 = vpop.permute.xlu0 %685
        %vm687 = vcmp.eq.s32.totalorder %v664, %v683
        %vm688 = vcmp.eq.s32.totalorder %v664, %v686
        %v689 = vsel %vm687, %v582, 0.0
        %v690 = vsel %vm688, %v584, 0.0
        %v691 = vsel %vm572, %v689, 0.0
        %692 = vadd.xlane.f32.xlu0 %v691
        %v693 = vpop.xlane.xlu0 %692
        %v694 = vsel %vm572, %v690, 0.0
        %695 = vadd.xlane.f32.xlu0 %v694
        %v696 = vpop.xlane.xlu0 %695
        %697 = vset.pattern.permute.xlu0 2
        %698 = vperm.xlu0 %697, %v661
        %v699 = vpop.permute.xlu0 %698
        %700 = vset.pattern.permute.xlu0 2
        %701 = vperm.xlu0 %700, %v662
        %v702 = vpop.permute.xlu0 %701
        %vm703 = vcmp.eq.s32.totalorder %v664, %v699
        %vm704 = vcmp.eq.s32.totalorder %v664, %v702
        %v705 = vsel %vm703, %v582, 0.0
        %v706 = vsel %vm704, %v584, 0.0
        %v707 = vsel %vm572, %v705, 0.0
        %708 = vadd.xlane.f32.xlu0 %v707
        %v709 = vpop.xlane.xlu0 %708
        %v710 = vsel %vm572, %v706, 0.0
        %711 = vadd.xlane.f32.xlu0 %v710
        %v712 = vpop.xlane.xlu0 %711
        %713 = vset.pattern.permute.xlu0 3
        %714 = vperm.xlu0 %713, %v661
        %v715 = vpop.permute.xlu0 %714
        %716 = vset.pattern.permute.xlu0 3
        %717 = vperm.xlu0 %716, %v662
        %v718 = vpop.permute.xlu0 %717
        %vm719 = vcmp.eq.s32.totalorder %v664, %v715
        %vm720 = vcmp.eq.s32.totalorder %v664, %v718
        %v721 = vsel %vm719, %v582, 0.0
        %v722 = vsel %vm720, %v584, 0.0
        %v723 = vsel %vm572, %v721, 0.0
        %724 = vadd.xlane.f32.xlu0 %v723
        %v725 = vpop.xlane.xlu0 %724
        %v726 = vsel %vm572, %v722, 0.0
        %727 = vadd.xlane.f32.xlu0 %v726
        %v728 = vpop.xlane.xlu0 %727
        %729 = vset.pattern.permute.xlu0 4
        %730 = vperm.xlu0 %729, %v661
        %v731 = vpop.permute.xlu0 %730
        %732 = vset.pattern.permute.xlu0 4
        %733 = vperm.xlu0 %732, %v662
        %v734 = vpop.permute.xlu0 %733
        %vm735 = vcmp.eq.s32.totalorder %v664, %v731
        %vm736 = vcmp.eq.s32.totalorder %v664, %v734
        %v737 = vsel %vm735, %v582, 0.0
        %v738 = vsel %vm736, %v584, 0.0
        %v739 = vsel %vm572, %v737, 0.0
        %740 = vadd.xlane.f32.xlu0 %v739
        %v741 = vpop.xlane.xlu0 %740
        %v742 = vsel %vm572, %v738, 0.0
        %743 = vadd.xlane.f32.xlu0 %v742
        %v744 = vpop.xlane.xlu0 %743
        %745 = vset.pattern.permute.xlu0 5
        %746 = vperm.xlu0 %745, %v661
        %v747 = vpop.permute.xlu0 %746
        %748 = vset.pattern.permute.xlu0 5
        %749 = vperm.xlu0 %748, %v662
        %v750 = vpop.permute.xlu0 %749
        %vm751 = vcmp.eq.s32.totalorder %v664, %v747
        %vm752 = vcmp.eq.s32.totalorder %v664, %v750
        %v753 = vsel %vm751, %v582, 0.0
        %v754 = vsel %vm752, %v584, 0.0
        %v755 = vsel %vm572, %v753, 0.0
        %756 = vadd.xlane.f32.xlu0 %v755
        %v757 = vpop.xlane.xlu0 %756
        %v758 = vsel %vm572, %v754, 0.0
        %759 = vadd.xlane.f32.xlu0 %v758
        %v760 = vpop.xlane.xlu0 %759
        %761 = vset.pattern.permute.xlu0 6
        %762 = vperm.xlu0 %761, %v661
        %v763 = vpop.permute.xlu0 %762
        %764 = vset.pattern.permute.xlu0 6
        %765 = vperm.xlu0 %764, %v662
        %v766 = vpop.permute.xlu0 %765
        %vm767 = vcmp.eq.s32.totalorder %v664, %v763
        %vm768 = vcmp.eq.s32.totalorder %v664, %v766
        %v769 = vsel %vm767, %v582, 0.0
        %v770 = vsel %vm768, %v584, 0.0
        %v771 = vsel %vm572, %v769, 0.0
        %772 = vadd.xlane.f32.xlu0 %v771
        %v773 = vpop.xlane.xlu0 %772
        %v774 = vsel %vm572, %v770, 0.0
        %775 = vadd.xlane.f32.xlu0 %v774
        %v776 = vpop.xlane.xlu0 %775
        %777 = vset.pattern.permute.xlu0 7
        %778 = vperm.xlu0 %777, %v661
        %v779 = vpop.permute.xlu0 %778
        %780 = vset.pattern.permute.xlu0 7
        %781 = vperm.xlu0 %780, %v662
        %v782 = vpop.permute.xlu0 %781
        %vm783 = vcmp.eq.s32.totalorder %v664, %v779
        %vm784 = vcmp.eq.s32.totalorder %v664, %v782
        %v785 = vsel %vm783, %v582, 0.0
        %v786 = vsel %vm784, %v584, 0.0
        %v787 = vsel %vm572, %v785, 0.0
        %788 = vadd.xlane.f32.xlu0 %v787
        %v789 = vpop.xlane.xlu0 %788
        %v790 = vsel %vm572, %v786, 0.0
        %791 = vadd.xlane.f32.xlu0 %v790
        %v792 = vpop.xlane.xlu0 %791
        %vm793 = vcmask 7168
        %v794 = vsel %vm793, %v677, %v693
        %v795 = vsel %vm793, %v680, %v696
        %vm796 = vcmask 15360
        %v797 = vsel %vm796, %v794, %v709
        %v798 = vsel %vm796, %v795, %v712
        %vm799 = vcmask 23552
        %v800 = vsel %vm799, %v797, %v725
        %v801 = vsel %vm799, %v798, %v728
        %vm802 = vcmask 31744
        %v803 = vsel %vm802, %v800, %v741
        %v804 = vsel %vm802, %v801, %v744
        %vm805 = vcmask 39936
        %v806 = vsel %vm805, %v803, %v757
        %v807 = vsel %vm805, %v804, %v760
        %vm808 = vcmask 48128
        %v809 = vsel %vm808, %v806, %v773
        %v810 = vsel %vm808, %v807, %v776
        %vm811 = vcmask 56320
        %v812 = vsel %vm811, %v809, %v789
        %v813 = vsel %vm811, %v810, %v792
        %v814 = vmul.f32 %v812, %v593
        %v815 = vmul.f32 %v813, %v594
        %816 = vst.msk [vmem:[%s436] sm:$0xff] %vm545, %v814
        %817 = vst.msk [vmem:[%s436 + $0x8] sm:$0xff] %vm545, %v815
        %s818 = sand.u32 %s183, 1
        %s819 = scalar_lea.sflag [#allocation4], %s818
        %s820 = sand.u32 %s183, 1
        %s821 = smul.addr %s820, 16
        %s822 = scalar_lea.vmem [#allocation3], %s821
        %p823 = scmp.lt.s32.totalorder %s26, 1
        %s824 = scalar_select %p823, %s26, 1
        %p825 = scmp.lt.s32.totalorder %s27, 3
        %s826 = scalar_select %p825, %s27, 3
        %s827 = smul.addr %s826, 2
        %s828 = smul.addr %s824, 8
        %s829 = sadd.s32 %s827, %s828
        %s830 = smul.addr %s829, 8
        %s831 = scalar_lea.vmem %s7, %s830
        // Predicated region
        $region94: #{tpu_custom_call.1} parent=80 // pred_check
          %p832 = pneg %p193
        $region95: #{tpu_custom_call.1} parent=80 // pred_check_branch
          %834 = sbr.rel (%p832) target = $region97
        $region96: #{tpu_custom_call.1} parent=80 // pred_region
          %836 = vsyncadd %s819, 0
          %s837 = smul.addr %s26, 2
          %s838 = smul.addr %s837, 8
          %s839 = scalar_lea.hbm %s6, %s838
          %s840 = sshll.u32 %s822, 4
          %s841 = int_to_ptr.vmem [resolvable:$true] %s840
          %s842 = sshll.u32 %s839, 4
          %s843 = int_to_ptr.hbm [resolvable:$true] %s842
          %848 = dma.vmem_to_hbm [thread:$0]  %s841, 256, %s843, %s819, 128, 128, 8
        $region97: #{tpu_custom_call.1} parent=80 // pred_fallthru
          _
        // Predicated region
        $region98: #{tpu_custom_call.1} parent=80 // pred_check
          %p849 = pneg %p221
        $region99: #{tpu_custom_call.1} parent=80 // pred_check_branch
          %851 = sbr.rel (%p849) target = $region101
        $region100: #{tpu_custom_call.1} parent=80 // pred_region
          _
        $region101: #{tpu_custom_call.1} parent=80 // pred_fallthru
          _
      $region81: #{tpu_custom_call.1} parent=5 // pred_fallthru
        _
      %p852 = scmp.le.s32.totalorder 2, %s17
      // Predicated region
      $region102: #{tpu_custom_call.1} parent=5 // pred_check
        %p853 = pneg %p852
      $region103: #{tpu_custom_call.1} parent=5 // pred_check_branch
        %855 = sbr.rel (%p853) target = $region105
      $region104: #{tpu_custom_call.1} parent=5 // pred_region
        %s856 = ssub.s32 %s17, 2
        // Predicated region
        $region106: #{tpu_custom_call.1} parent=104 // pred_check
          %p857 = pneg %p199
        $region107: #{tpu_custom_call.1} parent=104 // pred_check_branch
          %859 = sbr.rel (%p857) target = $region109
        $region108: #{tpu_custom_call.1} parent=104 // pred_region
          %s860 = sand.u32 %s184, 1
          %s861 = scalar_lea.sflag [#allocation4], %s860
          %s862 = sand.u32 %s184, 1
          %s863 = smul.addr %s862, 16
          %s864 = scalar_lea.vmem [#allocation3], %s863
          %866 = dma.done %s861, 256
        $region109: #{tpu_custom_call.1} parent=104 // pred_fallthru
          _
        // Predicated region
        $region110: #{tpu_custom_call.1} parent=104 // pred_check
          %p867 = pneg %p227
        $region111: #{tpu_custom_call.1} parent=104 // pred_check_branch
          %869 = sbr.rel (%p867) target = $region113
        $region112: #{tpu_custom_call.1} parent=104 // pred_region
          %p870 = scmp.lt.s32.totalorder %s28, 1
          %s871 = scalar_select %p870, %s28, 1
          %p872 = scmp.lt.s32.totalorder %s29, 3
          %s873 = scalar_select %p872, %s29, 3
          %s874 = smul.addr %s873, 2
          %s875 = smul.addr %s871, 8
          %s876 = sadd.s32 %s874, %s875
          %s877 = smul.addr %s876, 8
          %s878 = scalar_lea.vmem %s7, %s877
        $region113: #{tpu_custom_call.1} parent=104 // pred_fallthru
          _
      $region105: #{tpu_custom_call.1} parent=5 // pred_fallthru
        _
    $region6: #{tpu_custom_call.1} parent=1 // loop_footer
      %s21 = sadd.s32 1, %s17
    $region7: #{tpu_custom_call.1} parent=1 // loop_footer_branch
      %16 = sbr.rel target = $region3
    $region8: #{tpu_custom_call.1} parent=1 // loop_exit
      _
    %879 = vsyncpa [#allocation4], 1
    %s880 = scalar_lea.sflag [#allocation4], 1
    %881 = vsyncpa %s880, 1

</llo_original>
